<compile_context>
chip_gen: v6e
topology: v6e:2x2x1
jax: 0.10.0
libtpu: 0.0.40
codegen_flags: <defaults>
</compile_context>

<pallas_src>
import functools

import jax
import jax.numpy as jnp
from jax.experimental import pallas as pl
from jax.experimental.pallas import tpu as pltpu


def _upsample_conv_kernel(x_ref, w_ref, b_ref, m_ref, o_ref, *,
                          KH, KW, W, pad, C4, HW):
    # x_ref : (Cin, H*W)        one image, spatial row-major flattened (batch dim squeezed)
    # w_ref : (KH*KW, C4, Cin)  conv weights, one (C4, Cin) slab per tap
    # b_ref : (C4, 1)           bias (broadcast over lanes)
    # m_ref : (KH*KW, H*W)      per-tap validity masks (1.0 inside, 0.0 at the pad border)
    # o_ref : (C4, H*W)         conv+bias+LeakyReLU for this image, lane-dense
    x = x_ref[...]                                       # (Cin, HW)
    acc = jnp.zeros((C4, HW), jnp.float32)

    for t in range(KH * KW):                             # 9 taps, fully unrolled
        kh, kw = divmod(t, KW)
        d = (kh - pad) * W + (kw - pad)                  # flat-index offset of this tap
        shift = (-d) % HW                                # roll so lane p reads x[p + d]
        shifted = x if shift == 0 else pltpu.roll(x, shift=shift, axis=1)
        tap = shifted * m_ref[t:t + 1, :]                # zero out wrapped / out-of-row lanes
        acc = acc + jnp.dot(w_ref[t], tap,               # (C4,Cin) x (Cin,HW) -> (C4,HW)
                            preferred_element_type=jnp.float32)

    acc = acc + b_ref[...]                               # bias
    acc = jnp.maximum(acc, 0.1 * acc)                    # LeakyReLU(0.1)
    o_ref[...] = acc.astype(o_ref.dtype)                 # dense, unmasked store


def upsample_x2(x_nchw, weight_oihw, bias, kernel_size=3):
    """Forward pass of UpsampleX2.

    x_nchw:      (N, Cin, H, W)          -- PyTorch NCHW input
    weight_oihw: (Cout*4, Cin, KH, KW)   -- PyTorch conv weight layout
    bias:        (Cout*4,)
    returns      (N, Cout, 2H, 2W)       -- NCHW output
    """
    N, Cin, H, W = x_nchw.shape
    C4 = weight_oihw.shape[0]
    Cout = C4 // 4
    KH = KW = kernel_size
    assert kernel_size % 2 == 1, "odd kernel_size assumed (PyTorch padding=k//2 / SAME)"
    pad = kernel_size // 2
    HW = H * W

    # Input side: only a free reshape (no transpose / padding pass over x).
    x_flat = x_nchw.reshape(N, Cin, HW)
    # Weights as one (C4, Cin) slab per tap; bias as a lane-broadcastable column.
    w_taps = jnp.transpose(weight_oihw, (2, 3, 0, 1)).reshape(KH * KW, C4, Cin)
    b_col = bias.astype(jnp.float32).reshape(C4, 1)

    # Per-tap validity masks over the flat spatial axis (tiny, computed once).
    hh = jnp.arange(H)
    ww = jnp.arange(W)
    rows = []
    for kh in range(KH):
        for kw in range(KW):
            dh, dw = kh - pad, kw - pad
            rv = (hh + dh >= 0) & (hh + dh < H)
            cv = (ww + dw >= 0) & (ww + dw < W)
            rows.append((rv[:, None] & cv[None, :]).reshape(HW))
    masks = jnp.stack(rows, axis=0).astype(x_nchw.dtype)       # (KH*KW, HW)

    kernel = functools.partial(_upsample_conv_kernel, KH=KH, KW=KW, W=W,
                               pad=pad, C4=C4, HW=HW)
    itemsize = x_nchw.dtype.itemsize
    cost = pl.CostEstimate(
        flops=2 * N * C4 * KH * KW * Cin * HW,
        transcendentals=0,
        bytes_accessed=(N * Cin * HW + KH * KW * C4 * Cin + C4
                        + KH * KW * HW + N * C4 * HW) * itemsize)

    z = pl.pallas_call(
        kernel,
        out_shape=jax.ShapeDtypeStruct((N, C4, HW), x_nchw.dtype),
        grid_spec=pltpu.PrefetchScalarGridSpec(
            num_scalar_prefetch=0,
            grid=(N,),
            in_specs=[
                pl.BlockSpec((pl.Squeezed(), Cin, HW), lambda n: (n, 0, 0)),
                pl.BlockSpec((KH * KW, C4, Cin), lambda n: (0, 0, 0)),
                pl.BlockSpec((C4, 1), lambda n: (0, 0)),
                pl.BlockSpec((KH * KW, HW), lambda n: (0, 0)),
            ],
            out_specs=pl.BlockSpec((pl.Squeezed(), C4, HW), lambda n: (n, 0, 0)),
        ),
        compiler_params=pltpu.CompilerParams(
            dimension_semantics=("parallel",),
            vmem_limit_bytes=16 * 1024 * 1024,
        ),
        cost_estimate=cost,
    )(x_flat, w_taps, b_col, masks)

    # PixelShuffle(2): channel c4 = c*4 + i*2 + j  ->  out[n, c, 2h+i, 2w+j].
    # TODO(synk): fold this output-sized interleave into the kernel store.
    y = z.reshape(N, Cout, 2, 2, H, W)                    # (n, c, i, j, h, w)
    y = jnp.transpose(y, (0, 1, 4, 2, 5, 3))              # (n, c, h, i, w, j)
    return y.reshape(N, Cout, 2 * H, 2 * W)


if __name__ == "__main__":
    key = jax.random.PRNGKey(0)
    k_x, k_w, k_b = jax.random.split(key, 3)

    in_channels, out_channels, kernel_size = 4, 4, 3
    N, H, W = 2, 16, 16

    x = jax.random.normal(k_x, (N, in_channels, H, W), dtype=jnp.float32)
    weight = 0.1 * jax.random.normal(
        k_w, (out_channels * 4, in_channels, kernel_size, kernel_size),
        dtype=jnp.float32)
    bias = 0.1 * jax.random.normal(k_b, (out_channels * 4,), dtype=jnp.float32)

    out = upsample_x2(x, weight, bias, kernel_size)
    jax.block_until_ready(out)
    assert out.shape == (N, out_channels, 2 * H, 2 * W), out.shape

    # Reference check: XLA conv + bias + PixelShuffle + LeakyReLU.
    ref = jax.lax.conv_general_dilated(
        x, weight, window_strides=(1, 1), padding="SAME",
        dimension_numbers=("NCHW", "OIHW", "NCHW")) + bias[None, :, None, None]
    ref = ref.reshape(N, out_channels, 2, 2, H, W)
    ref = jnp.transpose(ref, (0, 1, 4, 2, 5, 3)).reshape(
        N, out_channels, 2 * H, 2 * W)
    ref = jnp.where(ref >= 0.0, ref, 0.1 * ref)
    assert jnp.allclose(out, ref, atol=1e-4, rtol=1e-4), \
        float(jnp.max(jnp.abs(out - ref)))

    print("KERNEL_OK")
</pallas_src>

<mosaic_0001>
module attributes {stable_mosaic.version = 11 : i64} {
  func.func @_upsample_conv_kernel(%arg0: i32, %arg1: memref<1x4x256xf32, #tpu.memory_space<vmem>>, %arg2: memref<9x16x4xf32, #tpu.memory_space<vmem>>, %arg3: memref<16x1xf32, #tpu.memory_space<vmem>>, %arg4: memref<9x256xf32, #tpu.memory_space<vmem>>, %arg5: memref<1x16x256xf32, #tpu.memory_space<vmem>>) attributes {dimension_semantics = [#tpu.dimension_semantics<parallel>], iteration_bounds = array<i64: 2>, scalar_prefetch = 0 : i64, scratch_operands = 0 : i64, tpu.core_type = #tpu.core_type<tc>, window_params = [{transform_indices = @transform_0, window_bounds = array<i64: 1, 4, 256>}, {pipeline_mode = #tpu.pipeline_mode<synchronous>, transform_indices = @transform_1, window_bounds = array<i64: 9, 16, 4>}, {pipeline_mode = #tpu.pipeline_mode<synchronous>, transform_indices = @transform_2, window_bounds = array<i64: 16, 1>}, {pipeline_mode = #tpu.pipeline_mode<synchronous>, transform_indices = @transform_3, window_bounds = array<i64: 9, 256>}, {transform_indices = @transform_4, window_bounds = array<i64: 1, 16, 256>}]} {
    %c0 = arith.constant 0 : index
    %c0_0 = arith.constant 0 : index
    %c0_1 = arith.constant 0 : index
    %0 = vector.load %arg1[%c0, %c0_0, %c0_1] : memref<1x4x256xf32, #tpu.memory_space<vmem>>, vector<1x4x256xf32>
    %1 = vector.shape_cast %0 : vector<1x4x256xf32> to vector<4x256xf32>
    %cst = arith.constant 0.000000e+00 : f32
    %2 = vector.broadcast %cst : f32 to vector<16x256xf32>
    %c17_i32 = arith.constant 17 : i32
    %3 = tpu.dynamic_rotate %1 by %c17_i32 dim 1 : vector<4x256xf32>, i32 -> vector<4x256xf32>
    %c0_2 = arith.constant 0 : index
    %c0_3 = arith.constant 0 : index
    %4 = vector.load %arg4[%c0_2, %c0_3] : memref<9x256xf32, #tpu.memory_space<vmem>>, vector<1x256xf32>
    %5 = vector.broadcast %4 : vector<1x256xf32> to vector<4x256xf32>
    %6 = arith.mulf %3, %5 : vector<4x256xf32>
    %c0_4 = arith.constant 0 : index
    %c0_5 = arith.constant 0 : index
    %c0_6 = arith.constant 0 : index
    %7 = vector.load %arg2[%c0_4, %c0_5, %c0_6] : memref<9x16x4xf32, #tpu.memory_space<vmem>>, vector<1x16x4xf32>
    %8 = vector.shape_cast %7 : vector<1x16x4xf32> to vector<16x4xf32>
    %cst_7 = arith.constant dense<0.000000e+00> : vector<16x256xf32>
    %9 = tpu.matmul %8, %6, %cst_7 {dimension_numbers = #tpu.dot_dimension_numbers<[1], [0], [0], [1], [0, 0, 1, 1], [], []>} : vector<16x4xf32>, vector<4x256xf32>, vector<16x256xf32> -> vector<16x256xf32>
    %10 = arith.addf %2, %9 : vector<16x256xf32>
    %c16_i32 = arith.constant 16 : i32
    %11 = tpu.dynamic_rotate %1 by %c16_i32 dim 1 : vector<4x256xf32>, i32 -> vector<4x256xf32>
    %c1 = arith.constant 1 : index
    %c0_8 = arith.constant 0 : index
    %12 = vector.load %arg4[%c1, %c0_8] : memref<9x256xf32, #tpu.memory_space<vmem>>, vector<1x256xf32>
    %13 = vector.broadcast %12 : vector<1x256xf32> to vector<4x256xf32>
    %14 = arith.mulf %11, %13 : vector<4x256xf32>
    %c1_9 = arith.constant 1 : index
    %c0_10 = arith.constant 0 : index
    %c0_11 = arith.constant 0 : index
    %15 = vector.load %arg2[%c1_9, %c0_10, %c0_11] : memref<9x16x4xf32, #tpu.memory_space<vmem>>, vector<1x16x4xf32>
    %16 = vector.shape_cast %15 : vector<1x16x4xf32> to vector<16x4xf32>
    %cst_12 = arith.constant dense<0.000000e+00> : vector<16x256xf32>
    %17 = tpu.matmul %16, %14, %cst_12 {dimension_numbers = #tpu.dot_dimension_numbers<[1], [0], [0], [1], [0, 0, 1, 1], [], []>} : vector<16x4xf32>, vector<4x256xf32>, vector<16x256xf32> -> vector<16x256xf32>
    %18 = arith.addf %10, %17 : vector<16x256xf32>
    %c15_i32 = arith.constant 15 : i32
    %19 = tpu.dynamic_rotate %1 by %c15_i32 dim 1 : vector<4x256xf32>, i32 -> vector<4x256xf32>
    %c2 = arith.constant 2 : index
    %c0_13 = arith.constant 0 : index
    %20 = vector.load %arg4[%c2, %c0_13] : memref<9x256xf32, #tpu.memory_space<vmem>>, vector<1x256xf32>
    %21 = vector.broadcast %20 : vector<1x256xf32> to vector<4x256xf32>
    %22 = arith.mulf %19, %21 : vector<4x256xf32>
    %c2_14 = arith.constant 2 : index
    %c0_15 = arith.constant 0 : index
    %c0_16 = arith.constant 0 : index
    %23 = vector.load %arg2[%c2_14, %c0_15, %c0_16] : memref<9x16x4xf32, #tpu.memory_space<vmem>>, vector<1x16x4xf32>
    %24 = vector.shape_cast %23 : vector<1x16x4xf32> to vector<16x4xf32>
    %cst_17 = arith.constant dense<0.000000e+00> : vector<16x256xf32>
    %25 = tpu.matmul %24, %22, %cst_17 {dimension_numbers = #tpu.dot_dimension_numbers<[1], [0], [0], [1], [0, 0, 1, 1], [], []>} : vector<16x4xf32>, vector<4x256xf32>, vector<16x256xf32> -> vector<16x256xf32>
    %26 = arith.addf %18, %25 : vector<16x256xf32>
    %c1_i32 = arith.constant 1 : i32
    %27 = tpu.dynamic_rotate %1 by %c1_i32 dim 1 : vector<4x256xf32>, i32 -> vector<4x256xf32>
    %c3 = arith.constant 3 : index
    %c0_18 = arith.constant 0 : index
    %28 = vector.load %arg4[%c3, %c0_18] : memref<9x256xf32, #tpu.memory_space<vmem>>, vector<1x256xf32>
    %29 = vector.broadcast %28 : vector<1x256xf32> to vector<4x256xf32>
    %30 = arith.mulf %27, %29 : vector<4x256xf32>
    %c3_19 = arith.constant 3 : index
    %c0_20 = arith.constant 0 : index
    %c0_21 = arith.constant 0 : index
    %31 = vector.load %arg2[%c3_19, %c0_20, %c0_21] : memref<9x16x4xf32, #tpu.memory_space<vmem>>, vector<1x16x4xf32>
    %32 = vector.shape_cast %31 : vector<1x16x4xf32> to vector<16x4xf32>
    %cst_22 = arith.constant dense<0.000000e+00> : vector<16x256xf32>
    %33 = tpu.matmul %32, %30, %cst_22 {dimension_numbers = #tpu.dot_dimension_numbers<[1], [0], [0], [1], [0, 0, 1, 1], [], []>} : vector<16x4xf32>, vector<4x256xf32>, vector<16x256xf32> -> vector<16x256xf32>
    %34 = arith.addf %26, %33 : vector<16x256xf32>
    %c4 = arith.constant 4 : index
    %c0_23 = arith.constant 0 : index
    %35 = vector.load %arg4[%c4, %c0_23] : memref<9x256xf32, #tpu.memory_space<vmem>>, vector<1x256xf32>
    %36 = vector.broadcast %35 : vector<1x256xf32> to vector<4x256xf32>
    %37 = arith.mulf %1, %36 : vector<4x256xf32>
    %c4_24 = arith.constant 4 : index
    %c0_25 = arith.constant 0 : index
    %c0_26 = arith.constant 0 : index
    %38 = vector.load %arg2[%c4_24, %c0_25, %c0_26] : memref<9x16x4xf32, #tpu.memory_space<vmem>>, vector<1x16x4xf32>
    %39 = vector.shape_cast %38 : vector<1x16x4xf32> to vector<16x4xf32>
    %cst_27 = arith.constant dense<0.000000e+00> : vector<16x256xf32>
    %40 = tpu.matmul %39, %37, %cst_27 {dimension_numbers = #tpu.dot_dimension_numbers<[1], [0], [0], [1], [0, 0, 1, 1], [], []>} : vector<16x4xf32>, vector<4x256xf32>, vector<16x256xf32> -> vector<16x256xf32>
    %41 = arith.addf %34, %40 : vector<16x256xf32>
    %c255_i32 = arith.constant 255 : i32
    %42 = tpu.dynamic_rotate %1 by %c255_i32 dim 1 : vector<4x256xf32>, i32 -> vector<4x256xf32>
    %c5 = arith.constant 5 : index
    %c0_28 = arith.constant 0 : index
    %43 = vector.load %arg4[%c5, %c0_28] : memref<9x256xf32, #tpu.memory_space<vmem>>, vector<1x256xf32>
    %44 = vector.broadcast %43 : vector<1x256xf32> to vector<4x256xf32>
    %45 = arith.mulf %42, %44 : vector<4x256xf32>
    %c5_29 = arith.constant 5 : index
    %c0_30 = arith.constant 0 : index
    %c0_31 = arith.constant 0 : index
    %46 = vector.load %arg2[%c5_29, %c0_30, %c0_31] : memref<9x16x4xf32, #tpu.memory_space<vmem>>, vector<1x16x4xf32>
    %47 = vector.shape_cast %46 : vector<1x16x4xf32> to vector<16x4xf32>
    %cst_32 = arith.constant dense<0.000000e+00> : vector<16x256xf32>
    %48 = tpu.matmul %47, %45, %cst_32 {dimension_numbers = #tpu.dot_dimension_numbers<[1], [0], [0], [1], [0, 0, 1, 1], [], []>} : vector<16x4xf32>, vector<4x256xf32>, vector<16x256xf32> -> vector<16x256xf32>
    %49 = arith.addf %41, %48 : vector<16x256xf32>
    %c241_i32 = arith.constant 241 : i32
    %50 = tpu.dynamic_rotate %1 by %c241_i32 dim 1 : vector<4x256xf32>, i32 -> vector<4x256xf32>
    %c6 = arith.constant 6 : index
    %c0_33 = arith.constant 0 : index
    %51 = vector.load %arg4[%c6, %c0_33] : memref<9x256xf32, #tpu.memory_space<vmem>>, vector<1x256xf32>
    %52 = vector.broadcast %51 : vector<1x256xf32> to vector<4x256xf32>
    %53 = arith.mulf %50, %52 : vector<4x256xf32>
    %c6_34 = arith.constant 6 : index
    %c0_35 = arith.constant 0 : index
    %c0_36 = arith.constant 0 : index
    %54 = vector.load %arg2[%c6_34, %c0_35, %c0_36] : memref<9x16x4xf32, #tpu.memory_space<vmem>>, vector<1x16x4xf32>
    %55 = vector.shape_cast %54 : vector<1x16x4xf32> to vector<16x4xf32>
    %cst_37 = arith.constant dense<0.000000e+00> : vector<16x256xf32>
    %56 = tpu.matmul %55, %53, %cst_37 {dimension_numbers = #tpu.dot_dimension_numbers<[1], [0], [0], [1], [0, 0, 1, 1], [], []>} : vector<16x4xf32>, vector<4x256xf32>, vector<16x256xf32> -> vector<16x256xf32>
    %57 = arith.addf %49, %56 : vector<16x256xf32>
    %c240_i32 = arith.constant 240 : i32
    %58 = tpu.dynamic_rotate %1 by %c240_i32 dim 1 : vector<4x256xf32>, i32 -> vector<4x256xf32>
    %c7 = arith.constant 7 : index
    %c0_38 = arith.constant 0 : index
    %59 = vector.load %arg4[%c7, %c0_38] : memref<9x256xf32, #tpu.memory_space<vmem>>, vector<1x256xf32>
    %60 = vector.broadcast %59 : vector<1x256xf32> to vector<4x256xf32>
    %61 = arith.mulf %58, %60 : vector<4x256xf32>
    %c7_39 = arith.constant 7 : index
    %c0_40 = arith.constant 0 : index
    %c0_41 = arith.constant 0 : index
    %62 = vector.load %arg2[%c7_39, %c0_40, %c0_41] : memref<9x16x4xf32, #tpu.memory_space<vmem>>, vector<1x16x4xf32>
    %63 = vector.shape_cast %62 : vector<1x16x4xf32> to vector<16x4xf32>
    %cst_42 = arith.constant dense<0.000000e+00> : vector<16x256xf32>
    %64 = tpu.matmul %63, %61, %cst_42 {dimension_numbers = #tpu.dot_dimension_numbers<[1], [0], [0], [1], [0, 0, 1, 1], [], []>} : vector<16x4xf32>, vector<4x256xf32>, vector<16x256xf32> -> vector<16x256xf32>
    %65 = arith.addf %57, %64 : vector<16x256xf32>
    %c239_i32 = arith.constant 239 : i32
    %66 = tpu.dynamic_rotate %1 by %c239_i32 dim 1 : vector<4x256xf32>, i32 -> vector<4x256xf32>
    %c8 = arith.constant 8 : index
    %c0_43 = arith.constant 0 : index
    %67 = vector.load %arg4[%c8, %c0_43] : memref<9x256xf32, #tpu.memory_space<vmem>>, vector<1x256xf32>
    %68 = vector.broadcast %67 : vector<1x256xf32> to vector<4x256xf32>
    %69 = arith.mulf %66, %68 : vector<4x256xf32>
    %c8_44 = arith.constant 8 : index
    %c0_45 = arith.constant 0 : index
    %c0_46 = arith.constant 0 : index
    %70 = vector.load %arg2[%c8_44, %c0_45, %c0_46] : memref<9x16x4xf32, #tpu.memory_space<vmem>>, vector<1x16x4xf32>
    %71 = vector.shape_cast %70 : vector<1x16x4xf32> to vector<16x4xf32>
    %cst_47 = arith.constant dense<0.000000e+00> : vector<16x256xf32>
    %72 = tpu.matmul %71, %69, %cst_47 {dimension_numbers = #tpu.dot_dimension_numbers<[1], [0], [0], [1], [0, 0, 1, 1], [], []>} : vector<16x4xf32>, vector<4x256xf32>, vector<16x256xf32> -> vector<16x256xf32>
    %73 = arith.addf %65, %72 : vector<16x256xf32>
    %c0_48 = arith.constant 0 : index
    %c0_49 = arith.constant 0 : index
    %74 = vector.load %arg3[%c0_48, %c0_49] : memref<16x1xf32, #tpu.memory_space<vmem>>, vector<16x1xf32>
    %75 = vector.broadcast %74 : vector<16x1xf32> to vector<16x256xf32>
    %76 = arith.addf %73, %75 : vector<16x256xf32>
    %cst_50 = arith.constant 1.000000e-01 : f32
    %77 = vector.broadcast %cst_50 : f32 to vector<16x256xf32>
    %78 = arith.mulf %77, %76 : vector<16x256xf32>
    %79 = arith.maximumf %76, %78 : vector<16x256xf32>
    %c0_51 = arith.constant 0 : index
    %c0_52 = arith.constant 0 : index
    %c0_53 = arith.constant 0 : index
    %80 = vector.load %arg5[%c0_51, %c0_52, %c0_53] : memref<1x16x256xf32, #tpu.memory_space<vmem>>, vector<1x16x256xf32>
    %81 = vector.shape_cast %80 : vector<1x16x256xf32> to vector<16x256xf32>
    %82 = vector.shape_cast %79 : vector<16x256xf32> to vector<1x16x256xf32>
    tpu.vector_store %arg5[%c0_51, %c0_52, %c0_53], %82 {strides = array<i32>} : memref<1x16x256xf32, #tpu.memory_space<vmem>>, vector<1x16x256xf32>,
    return
  }
  func.func @transform_0(%arg0: i32) -> (i32, i32, i32) {
    %c0_i32 = arith.constant 0 : i32
    %c0_i32_0 = arith.constant 0 : i32
    %c0_i32_1 = arith.constant 0 : i32
    return %arg0, %c0_i32, %c0_i32_0 : i32, i32, i32
  }
  func.func @transform_1(%arg0: i32) -> (i32, i32, i32) {
    %c0_i32 = arith.constant 0 : i32
    %c0_i32_0 = arith.constant 0 : i32
    %c0_i32_1 = arith.constant 0 : i32
    %c0_i32_2 = arith.constant 0 : i32
    return %c0_i32, %c0_i32_0, %c0_i32_1 : i32, i32, i32
  }
  func.func @transform_2(%arg0: i32) -> (i32, i32) {
    %c0_i32 = arith.constant 0 : i32
    %c0_i32_0 = arith.constant 0 : i32
    %c0_i32_1 = arith.constant 0 : i32
    return %c0_i32, %c0_i32_0 : i32, i32
  }
  func.func @transform_3(%arg0: i32) -> (i32, i32) {
    %c0_i32 = arith.constant 0 : i32
    %c0_i32_0 = arith.constant 0 : i32
    %c0_i32_1 = arith.constant 0 : i32
    return %c0_i32, %c0_i32_0 : i32, i32
  }
  func.func @transform_4(%arg0: i32) -> (i32, i32, i32) {
    %c0_i32 = arith.constant 0 : i32
    %c0_i32_0 = arith.constant 0 : i32
    %c0_i32_1 = arith.constant 0 : i32
    return %arg0, %c0_i32, %c0_i32_0 : i32, i32, i32
  }
}

</mosaic_0001>

<llo_original>
// kernel: tpu_custom_call.1
$region0: #{tpu_custom_call.1}
  #allocation0 [shape = 'u32[]', space=smem, size = 0x4, offset = 0x4, fixed_abs, tag = 'smem constant byte address 0x4 - core index']
  #allocation1 [shape = 'u32[144,128]{1,0:T(1,128)}', space=vmem, size = 0x12000, scoped, tag = 'internal scratch']
  %s0 = inlined_call_operand.vmem [shape: f32[2,4,256], index: 0, kind: input, shape index: {}]
  %s1 = inlined_call_operand.vmem [shape: f32[9,16,4], index: 1, kind: input, shape index: {}]
  %s2 = inlined_call_operand.vmem [shape: f32[16,1], index: 2, kind: input, shape index: {}]
  %s3 = inlined_call_operand.vmem [shape: f32[9,256], index: 3, kind: input, shape index: {}]
  %s4 = inlined_call_operand.hbm [shape: f32[2,16,256], index: 4, kind: output, shape index: {}]
  %s5 = sld [smem:[#allocation0]]
  $region49: #{tpu_custom_call.1} parent=0
    _
  %s7 = ssub.s32 1, %s5
  %s8 = scalar_select 0, %s7, %s5
  $region1: #{tpu_custom_call.1} parent=0
    #allocation2 [shape = 'u8[32768]{0}', space=vmem, size = 0x8000, scoped, tag = 'output window, operand 0']
    #allocation3 [shape = 's32[2]{0}', space=sflag, size = 0x8, scoped, tag = 'scoped memory for tpu_custom_call.1']
    %9 = vsyncpa [#allocation3], 0
    %s10 = scalar_lea.sflag [#allocation3], 1
    %11 = vsyncpa %s10, 0
    loop: start=0, step=1, limit=4
    $region2: #{tpu_custom_call.1} parent=1 // loop_pre_header
      _
    $region3: #{tpu_custom_call.1} parent=1 // loop_header
      %s13 = sphi 0, %s17
      %p14 = scmp.ge.s32.totalorder %s13, 4
      %s23 = sphi 0, %s25
      %s26 = sphi 0, %s23
      %s27 = sphi 0, %s26
      %s43 = sphi 0, %s27
      %s47 = sphi 0, %s47
      %s49 = sphi 0, %s47
      %s50 = sphi 0, %s49
      %s64 = sphi 0, %s50
      %s68 = sphi 0, %s68
      %s70 = sphi 0, %s68
      %s71 = sphi 0, %s70
      %s85 = sphi 0, %s71
      %s89 = sphi 0, %s89
      %s91 = sphi 0, %s89
      %s92 = sphi 0, %s91
      %s106 = sphi 0, %s92
      %s112 = sphi 0, %s114
      %s115 = sphi 0, %s112
      %s116 = sphi 0, %s115
      %s132 = sphi 0, %s116
    $region4: #{tpu_custom_call.1} parent=1 // loop_header_branch
      %16 = sbr.rel (%p14) target = $region8
    $region5: #{tpu_custom_call.1} parent=1 // loop_body
      %s18 = ssub.s32 %s13, 1
      %s19 = ssub.s32 %s13, 2
      %s20 = sadd.s32 %s13, 1
      %s21 = ssub.s32 %s13, %s20
      %p22 = scmp.eq.s32.totalorder %s21, 0
      %s24 = sadd.s32 %s23, 1
      %s25 = scalar_select %p22, %s23, %s24
      %p28 = pneg %p22
      %p29 = scmp.eq.s32.totalorder %s13, 1
      %p30 = por %p28, %p29
      %p31 = scmp.ne.s32.totalorder %s23, %s26
      %p32 = scmp.eq.s32.totalorder %s13, 0
      %p33 = por %p31, %p32
      %p34 = scmp.ne.s32.totalorder %s23, %s26
      %p35 = scmp.eq.s32.totalorder %s18, 1
      %p36 = por %p34, %p35
      %p37 = scmp.ne.s32.totalorder %s26, %s27
      %p38 = scmp.eq.s32.totalorder %s18, 0
      %p39 = por %p37, %p38
      %p40 = scmp.ne.s32.totalorder %s26, %s27
      %p41 = scmp.eq.s32.totalorder %s19, 1
      %p42 = por %p40, %p41
      %p44 = scmp.ne.s32.totalorder %s27, %s43
      %p45 = scmp.eq.s32.totalorder %s19, 0
      %p46 = por %p44, %p45
      %s48 = sadd.s32 %s47, 1
      %p51 = scmp.eq.s32.totalorder %s13, 1
      %p52 = scmp.ne.s32.totalorder %s47, %s49
      %p53 = scmp.eq.s32.totalorder %s13, 0
      %p54 = por %p52, %p53
      %p55 = scmp.ne.s32.totalorder %s47, %s49
      %p56 = scmp.eq.s32.totalorder %s18, 1
      %p57 = por %p55, %p56
      %p58 = scmp.ne.s32.totalorder %s49, %s50
      %p59 = scmp.eq.s32.totalorder %s18, 0
      %p60 = por %p58, %p59
      %p61 = scmp.ne.s32.totalorder %s49, %s50
      %p62 = scmp.eq.s32.totalorder %s19, 1
      %p63 = por %p61, %p62
      %p65 = scmp.ne.s32.totalorder %s50, %s64
      %p66 = scmp.eq.s32.totalorder %s19, 0
      %p67 = por %p65, %p66
      %s69 = sadd.s32 %s68, 1
      %p72 = scmp.eq.s32.totalorder %s13, 1
      %p73 = scmp.ne.s32.totalorder %s68, %s70
      %p74 = scmp.eq.s32.totalorder %s13, 0
      %p75 = por %p73, %p74
      %p76 = scmp.ne.s32.totalorder %s68, %s70
      %p77 = scmp.eq.s32.totalorder %s18, 1
      %p78 = por %p76, %p77
      %p79 = scmp.ne.s32.totalorder %s70, %s71
      %p80 = scmp.eq.s32.totalorder %s18, 0
      %p81 = por %p79, %p80
      %p82 = scmp.ne.s32.totalorder %s70, %s71
      %p83 = scmp.eq.s32.totalorder %s19, 1
      %p84 = por %p82, %p83
      %p86 = scmp.ne.s32.totalorder %s71, %s85
      %p87 = scmp.eq.s32.totalorder %s19, 0
      %p88 = por %p86, %p87
      %s90 = sadd.s32 %s89, 1
      %p93 = scmp.eq.s32.totalorder %s13, 1
      %p94 = scmp.ne.s32.totalorder %s89, %s91
      %p95 = scmp.eq.s32.totalorder %s13, 0
      %p96 = por %p94, %p95
      %p97 = scmp.ne.s32.totalorder %s89, %s91
      %p98 = scmp.eq.s32.totalorder %s18, 1
      %p99 = por %p97, %p98
      %p100 = scmp.ne.s32.totalorder %s91, %s92
      %p101 = scmp.eq.s32.totalorder %s18, 0
      %p102 = por %p100, %p101
      %p103 = scmp.ne.s32.totalorder %s91, %s92
      %p104 = scmp.eq.s32.totalorder %s19, 1
      %p105 = por %p103, %p104
      %p107 = scmp.ne.s32.totalorder %s92, %s106
      %p108 = scmp.eq.s32.totalorder %s19, 0
      %p109 = por %p107, %p108
      %s110 = ssub.s32 %s13, %s20
      %p111 = scmp.eq.s32.totalorder %s110, 0
      %s113 = sadd.s32 %s112, 1
      %s114 = scalar_select %p111, %s112, %s113
      %p117 = pneg %p111
      %p118 = scmp.eq.s32.totalorder %s13, 1
      %p119 = por %p117, %p118
      %p120 = scmp.ne.s32.totalorder %s112, %s115
      %p121 = scmp.eq.s32.totalorder %s13, 0
      %p122 = por %p120, %p121
      %p123 = scmp.ne.s32.totalorder %s112, %s115
      %p124 = scmp.eq.s32.totalorder %s18, 1
      %p125 = por %p123, %p124
      %p126 = scmp.ne.s32.totalorder %s115, %s116
      %p127 = scmp.eq.s32.totalorder %s18, 0
      %p128 = por %p126, %p127
      %p129 = scmp.ne.s32.totalorder %s115, %s116
      %p130 = scmp.eq.s32.totalorder %s19, 1
      %p131 = por %p129, %p130
      %p133 = scmp.ne.s32.totalorder %s116, %s132
      %p134 = scmp.eq.s32.totalorder %s19, 0
      %p135 = por %p133, %p134
      %p136 = scmp.le.s32.totalorder 1, %s13
      %p137 = scmp.lt.s32.totalorder %s13, 3
      %p138 = pnand %p136, %p137
      %p139 = pneg %p138
      // Predicated region
      $region9: #{tpu_custom_call.1} parent=5 // pred_check
        _
      $region10: #{tpu_custom_call.1} parent=5 // pred_check_branch
        %141 = sbr.rel (%p138) target = $region12
      $region11: #{tpu_custom_call.1} parent=5 // pred_region
        %s142 = ssub.s32 %s13, 1
        // Predicated region
        $region13: #{tpu_custom_call.1} parent=11 // pred_check
          %p143 = pneg %p60
        $region14: #{tpu_custom_call.1} parent=11 // pred_check_branch
          %145 = sbr.rel (%p143) target = $region16
        $region15: #{tpu_custom_call.1} parent=11 // pred_region
          _
        $region16: #{tpu_custom_call.1} parent=11 // pred_fallthru
          _
        // Predicated region
        $region17: #{tpu_custom_call.1} parent=11 // pred_check
          %p146 = pneg %p81
        $region18: #{tpu_custom_call.1} parent=11 // pred_check_branch
          %148 = sbr.rel (%p146) target = $region20
        $region19: #{tpu_custom_call.1} parent=11 // pred_region
          _
        $region20: #{tpu_custom_call.1} parent=11 // pred_fallthru
          _
        // Predicated region
        $region21: #{tpu_custom_call.1} parent=11 // pred_check
          %p149 = pneg %p102
        $region22: #{tpu_custom_call.1} parent=11 // pred_check_branch
          %151 = sbr.rel (%p149) target = $region24
        $region23: #{tpu_custom_call.1} parent=11 // pred_region
          _
        $region24: #{tpu_custom_call.1} parent=11 // pred_fallthru
          _
      $region12: #{tpu_custom_call.1} parent=5 // pred_fallthru
        _
      %p152 = scmp.lt.s32.totalorder %s13, 2
      // Predicated region
      $region25: #{tpu_custom_call.1} parent=5 // pred_check
        %p153 = pneg %p152
      $region26: #{tpu_custom_call.1} parent=5 // pred_check_branch
        %155 = sbr.rel (%p153) target = $region28
      $region27: #{tpu_custom_call.1} parent=5 // pred_region
        // Predicated region
        $region29: #{tpu_custom_call.1} parent=27 // pred_check
          %p156 = pneg %p33
        $region30: #{tpu_custom_call.1} parent=27 // pred_check_branch
          %158 = sbr.rel (%p156) target = $region32
        $region31: #{tpu_custom_call.1} parent=27 // pred_region
          %p159 = scmp.lt.s32.totalorder %s13, 1
          %s160 = scalar_select %p159, %s13, 1
          %s161 = smul.addr %s160, 2
          %s162 = smul.addr %s161, 4
          %s163 = scalar_lea.vmem %s0, %s162
        $region32: #{tpu_custom_call.1} parent=27 // pred_fallthru
          _
      $region28: #{tpu_custom_call.1} parent=5 // pred_fallthru
        _
      %p164 = scmp.le.s32.totalorder 1, %s13
      %p165 = scmp.lt.s32.totalorder %s13, 3
      %p166 = pnand %p164, %p165
      %p167 = pneg %p166
      // Predicated region
      $region33: #{tpu_custom_call.1} parent=5 // pred_check
        _
      $region34: #{tpu_custom_call.1} parent=5 // pred_check_branch
        %169 = sbr.rel (%p166) target = $region36
      $region35: #{tpu_custom_call.1} parent=5 // pred_region
        %s170 = ssub.s32 %s13, 1
        %p171 = scmp.lt.s32.totalorder %s18, 1
        %s172 = scalar_select %p171, %s18, 1
        %s173 = smul.addr %s172, 2
        %s174 = smul.addr %s173, 4
        %s175 = scalar_lea.vmem %s0, %s174
        %p176 = pneg %p39
        %p177 = pneg %p36
        %p178 = pneg %p60
        %p179 = pneg %p57
        %p180 = pneg %p81
        %p181 = pneg %p78
        %p182 = pneg %p102
        %p183 = pneg %p99
        %p184 = pneg %p128
        %p185 = pneg %p125
        %s186 = sand.u32 %s115, 1
        %s187 = scalar_lea.sflag [#allocation3], %s186
        %s188 = sand.u32 %s115, 1
        %s189 = smul.addr %s188, 32
        %s190 = scalar_lea.vmem [#allocation2], %s189
        %p191 = scmp.lt.s32.totalorder %s18, 1
        %s192 = scalar_select %p191, %s18, 1
        %s193 = smul.addr %s192, 2
        %s194 = smul.addr %s193, 4
        %s195 = scalar_lea.vmem %s0, %s194
        %v196 = vld [vmem:[%s195] sm:$0xff]
        %v198 = vcombine.high %v196, %v196
        %200 = vrot.lane.b32.xlu0 %v196, 17
        %v201 = vpop.permute.xlu0 %200
        %202 = vrot.lane.b32.xlu0 %v198, 17
        %v203 = vpop.permute.xlu0 %202
        %v204 = vlaneseq
        %v205 = vand.u32 %v204, 127
        %vm206 = vcmp.lt.s32.totalorder %v205, 17
        %v207 = vsel %vm206, %v201, %v203
        %v208 = vsel %vm206, %v203, %v201
        %v209 = vld [vmem:[%s3] ss:$8 sm:$0x3]
        %v211 = vlaneseq
        %v212 = vshrl.u32 %v211, 7
        %v213 = vsub.s32 0, %v212
        %v214 = vrot.slane %v209, %v213
        %v215 = vlaneseq
        %v216 = vshrl.u32 %v215, 7
        %v217 = vsub.s32 1, %v216
        %v218 = vrot.slane %v209, %v217
        %v221 = vmul.f32 %v208, %v214
        %v222 = vmul.f32 %v207, %v218
        %v223 = vld [vmem:[%s1] sm:$0xff]
        %v224 = vld [vmem:[%s1 + $0x8] sm:$0xff]
        %225 = vrot.lane.b32.xlu0 %v196, 16
        %v226 = vpop.permute.xlu0 %225
        %227 = vrot.lane.b32.xlu0 %v198, 16
        %v228 = vpop.permute.xlu0 %227
        %vm229 = vcmp.lt.s32.totalorder %v205, 16
        %v230 = vsel %vm229, %v226, %v228
        %v231 = vsel %vm229, %v228, %v226
        %s232 = scalar_lea.vmem %s3, 1
        %v233 = vld [vmem:[%s232] ss:$8 sm:$0x3]
        %v235 = vlaneseq
        %v236 = vshrl.u32 %v235, 7
        %v237 = vsub.s32 0, %v236
        %v238 = vrot.slane %v233, %v237
        %v239 = vlaneseq
        %v240 = vshrl.u32 %v239, 7
        %v241 = vsub.s32 1, %v240
        %v242 = vrot.slane %v233, %v241
        %v245 = vmul.f32 %v231, %v238
        %v246 = vmul.f32 %v230, %v242
        %s247 = scalar_lea.vmem %s1, 16
        %v248 = vld [vmem:[%s247] sm:$0xff]
        %v249 = vld [vmem:[%s247 + $0x8] sm:$0xff]
        %vm250 = vcmask 31744
        %v252 = vsel %vm250, %v248, 0
        %v255 = vsel %vm250, %v249, 0
        %vm257 = vcmask 1043456
        %v259 = vsel %vm257, %v245, 0
        %v262 = vsel %vm257, %v246, 0
        %264 = vmatprep.subr.mxu0 0.0
        %265 = vmatpush1.msra.mxu0 0.0
        %266 = vmatprep.subr.mxu0 0.0
        %267 = vmatpush1.msra.mxu0 0.0
        %268 = vmatprep.subr.mxu0 0.0
        %269 = vmatpush1.msra.mxu0 0.0
        %270 = vmatprep.subr.mxu0 0.0
        %271 = vmatpush1.msra.mxu0 0.0
        %272 = vmatprep.subr.mxu0 0.0
        %273 = vmatpush1.msra.mxu0 0.0
        %274 = vmatprep.subr.mxu0 0.0
        %275 = vmatpush1.msra.mxu0 0.0
        %276 = vmatprep.subr.mxu0 0.0
        %277 = vmatpush1.msra.mxu0 0.0
        %278 = vmatprep.subr.mxu0 0.0
        %279 = vmatpush1.msra.mxu0 0.0
        %280 = vmatprep.subr.mxu0 0.0
        %281 = vmatpush1.msra.mxu0 0.0
        %282 = vmatprep.subr.mxu0 0.0
        %283 = vmatpush1.msra.mxu0 0.0
        %284 = vmatprep.subr.mxu0 0.0
        %285 = vmatpush1.msra.mxu0 0.0
        %286 = vmatprep.subr.mxu0 0.0
        %287 = vmatpush1.msra.mxu0 0.0
        %288 = vmatprep.subr.mxu0 0.0
        %289 = vmatpush1.msra.mxu0 0.0
        %290 = vmatprep.subr.mxu0 0.0
        %291 = vmatpush1.msra.mxu0 0.0
        %292 = vmatprep.subr.mxu0 0.0
        %293 = vmatpush1.msra.mxu0 0.0
        %294 = vmatprep.subr.mxu0 %v262
        %295 = vmatpush1.msra.mxu0 %v259
        %296 = vmatprep.subr.mxu0 0.0
        %297 = vmatpush2.msra.mxu0 0.0
        %298 = vmatprep.subr.mxu0 0.0
        %299 = vmatpush2.msra.mxu0 0.0
        %300 = vmatprep.subr.mxu0 0.0
        %301 = vmatpush2.msra.mxu0 0.0
        %302 = vmatprep.subr.mxu0 0.0
        %303 = vmatpush2.msra.mxu0 0.0
        %304 = vmatprep.subr.mxu0 0.0
        %305 = vmatpush2.msra.mxu0 0.0
        %306 = vmatprep.subr.mxu0 0.0
        %307 = vmatpush2.msra.mxu0 0.0
        %308 = vmatprep.subr.mxu0 0.0
        %309 = vmatpush2.msra.mxu0 0.0
        %310 = vmatprep.subr.mxu0 0.0
        %311 = vmatpush2.msra.mxu0 0.0
        %312 = vmatprep.subr.mxu0 0.0
        %313 = vmatpush2.msra.mxu0 0.0
        %314 = vmatprep.subr.mxu0 0.0
        %315 = vmatpush2.msra.mxu0 0.0
        %316 = vmatprep.subr.mxu0 0.0
        %317 = vmatpush2.msra.mxu0 0.0
        %318 = vmatprep.subr.mxu0 0.0
        %319 = vmatpush2.msra.mxu0 0.0
        %320 = vmatprep.subr.mxu0 0.0
        %321 = vmatpush2.msra.mxu0 0.0
        %322 = vmatprep.subr.mxu0 0.0
        %323 = vmatpush2.msra.mxu0 0.0
        %324 = vmatprep.subr.mxu0 0.0
        %325 = vmatpush2.msra.mxu0 0.0
        %326 = vmatprep.subr.mxu0 0.0
        %327 = vmatpush2.msra.mxu0 0.0
        %328 = vmatprep.mubr.f32.mxu0 0.0
        %329 = vmatmul.mubr.f32.gmra.mxu0 %v252
        %v330 = vpop.f32.mrf.mxu0
        %v331 = vadd.f32 0.0, %v330
        %v332 = vpop.f32.mrf.mxu0
        %v333 = vadd.f32 0.0, %v332
        %334 = vmatprep.mubr.f32.mxu0 0.0
        %335 = vmatmul.mubr.f32.gmra.mxu0 %v255
        %v336 = vpop.f32.mrf.mxu0
        %v337 = vadd.f32 0.0, %v336
        %v338 = vpop.f32.mrf.mxu0
        %v339 = vadd.f32 0.0, %v338
        %340 = vdwg.mxu0
        %v342 = vsel %vm250, %v223, 0
        %v345 = vsel %vm250, %v224, 0
        %v348 = vsel %vm257, %v221, 0
        %v351 = vsel %vm257, %v222, 0
        %353 = vmatprep.subr.mxu0 0.0
        %354 = vmatpush1.msra.mxu0 0.0
        %355 = vmatprep.subr.mxu0 0.0
        %356 = vmatpush1.msra.mxu0 0.0
        %357 = vmatprep.subr.mxu0 0.0
        %358 = vmatpush1.msra.mxu0 0.0
        %359 = vmatprep.subr.mxu0 0.0
        %360 = vmatpush1.msra.mxu0 0.0
        %361 = vmatprep.subr.mxu0 0.0
        %362 = vmatpush1.msra.mxu0 0.0
        %363 = vmatprep.subr.mxu0 0.0
        %364 = vmatpush1.msra.mxu0 0.0
        %365 = vmatprep.subr.mxu0 0.0
        %366 = vmatpush1.msra.mxu0 0.0
        %367 = vmatprep.subr.mxu0 0.0
        %368 = vmatpush1.msra.mxu0 0.0
        %369 = vmatprep.subr.mxu0 0.0
        %370 = vmatpush1.msra.mxu0 0.0
        %371 = vmatprep.subr.mxu0 0.0
        %372 = vmatpush1.msra.mxu0 0.0
        %373 = vmatprep.subr.mxu0 0.0
        %374 = vmatpush1.msra.mxu0 0.0
        %375 = vmatprep.subr.mxu0 0.0
        %376 = vmatpush1.msra.mxu0 0.0
        %377 = vmatprep.subr.mxu0 0.0
        %378 = vmatpush1.msra.mxu0 0.0
        %379 = vmatprep.subr.mxu0 0.0
        %380 = vmatpush1.msra.mxu0 0.0
        %381 = vmatprep.subr.mxu0 0.0
        %382 = vmatpush1.msra.mxu0 0.0
        %383 = vmatprep.subr.mxu0 %v351
        %384 = vmatpush1.msra.mxu0 %v348
        %385 = vmatprep.subr.mxu0 0.0
        %386 = vmatpush2.msra.mxu0 0.0
        %387 = vmatprep.subr.mxu0 0.0
        %388 = vmatpush2.msra.mxu0 0.0
        %389 = vmatprep.subr.mxu0 0.0
        %390 = vmatpush2.msra.mxu0 0.0
        %391 = vmatprep.subr.mxu0 0.0
        %392 = vmatpush2.msra.mxu0 0.0
        %393 = vmatprep.subr.mxu0 0.0
        %394 = vmatpush2.msra.mxu0 0.0
        %395 = vmatprep.subr.mxu0 0.0
        %396 = vmatpush2.msra.mxu0 0.0
        %397 = vmatprep.subr.mxu0 0.0
        %398 = vmatpush2.msra.mxu0 0.0
        %399 = vmatprep.subr.mxu0 0.0
        %400 = vmatpush2.msra.mxu0 0.0
        %401 = vmatprep.subr.mxu0 0.0
        %402 = vmatpush2.msra.mxu0 0.0
        %403 = vmatprep.subr.mxu0 0.0
        %404 = vmatpush2.msra.mxu0 0.0
        %405 = vmatprep.subr.mxu0 0.0
        %406 = vmatpush2.msra.mxu0 0.0
        %407 = vmatprep.subr.mxu0 0.0
        %408 = vmatpush2.msra.mxu0 0.0
        %409 = vmatprep.subr.mxu0 0.0
        %410 = vmatpush2.msra.mxu0 0.0
        %411 = vmatprep.subr.mxu0 0.0
        %412 = vmatpush2.msra.mxu0 0.0
        %413 = vmatprep.subr.mxu0 0.0
        %414 = vmatpush2.msra.mxu0 0.0
        %415 = vmatprep.subr.mxu0 0.0
        %416 = vmatpush2.msra.mxu0 0.0
        %417 = vmatprep.mubr.f32.mxu0 0.0
        %418 = vmatmul.mubr.f32.gmra.mxu0 %v342
        %v419 = vpop.f32.mrf.mxu0
        %v420 = vadd.f32 %v331, %v419
        %v421 = vpop.f32.mrf.mxu0
        %v422 = vadd.f32 %v333, %v421
        %423 = vmatprep.mubr.f32.mxu0 0.0
        %424 = vmatmul.mubr.f32.gmra.mxu0 %v345
        %v425 = vpop.f32.mrf.mxu0
        %v426 = vadd.f32 %v337, %v425
        %v427 = vpop.f32.mrf.mxu0
        %v428 = vadd.f32 %v339, %v427
        %429 = vdwg.mxu0
        %430 = vrot.lane.b32.xlu0 %v196, 15
        %v431 = vpop.permute.xlu0 %430
        %432 = vrot.lane.b32.xlu0 %v198, 15
        %v433 = vpop.permute.xlu0 %432
        %vm434 = vcmp.lt.s32.totalorder %v205, 15
        %v435 = vsel %vm434, %v431, %v433
        %v436 = vsel %vm434, %v433, %v431
        %s437 = scalar_lea.vmem %s3, 2
        %v438 = vld [vmem:[%s437] ss:$8 sm:$0x3]
        %v440 = vlaneseq
        %v441 = vshrl.u32 %v440, 7
        %v442 = vsub.s32 0, %v441
        %v443 = vrot.slane %v438, %v442
        %v444 = vlaneseq
        %v445 = vshrl.u32 %v444, 7
        %v446 = vsub.s32 1, %v445
        %v447 = vrot.slane %v438, %v446
        %v450 = vmul.f32 %v436, %v443
        %v451 = vmul.f32 %v435, %v447
        %s452 = scalar_lea.vmem %s1, 32
        %v453 = vld [vmem:[%s452] sm:$0xff]
        %v454 = vld [vmem:[%s452 + $0x8] sm:$0xff]
        %v456 = vsel %vm250, %v453, 0
        %v459 = vsel %vm250, %v454, 0
        %v462 = vsel %vm257, %v450, 0
        %v465 = vsel %vm257, %v451, 0
        %467 = vmatprep.subr.mxu0 0.0
        %468 = vmatpush1.msra.mxu0 0.0
        %469 = vmatprep.subr.mxu0 0.0
        %470 = vmatpush1.msra.mxu0 0.0
        %471 = vmatprep.subr.mxu0 0.0
        %472 = vmatpush1.msra.mxu0 0.0
        %473 = vmatprep.subr.mxu0 0.0
        %474 = vmatpush1.msra.mxu0 0.0
        %475 = vmatprep.subr.mxu0 0.0
        %476 = vmatpush1.msra.mxu0 0.0
        %477 = vmatprep.subr.mxu0 0.0
        %478 = vmatpush1.msra.mxu0 0.0
        %479 = vmatprep.subr.mxu0 0.0
        %480 = vmatpush1.msra.mxu0 0.0
        %481 = vmatprep.subr.mxu0 0.0
        %482 = vmatpush1.msra.mxu0 0.0
        %483 = vmatprep.subr.mxu0 0.0
        %484 = vmatpush1.msra.mxu0 0.0
        %485 = vmatprep.subr.mxu0 0.0
        %486 = vmatpush1.msra.mxu0 0.0
        %487 = vmatprep.subr.mxu0 0.0
        %488 = vmatpush1.msra.mxu0 0.0
        %489 = vmatprep.subr.mxu0 0.0
        %490 = vmatpush1.msra.mxu0 0.0
        %491 = vmatprep.subr.mxu0 0.0
        %492 = vmatpush1.msra.mxu0 0.0
        %493 = vmatprep.subr.mxu0 0.0
        %494 = vmatpush1.msra.mxu0 0.0
        %495 = vmatprep.subr.mxu0 0.0
        %496 = vmatpush1.msra.mxu0 0.0
        %497 = vmatprep.subr.mxu0 %v465
        %498 = vmatpush1.msra.mxu0 %v462
        %499 = vmatprep.subr.mxu0 0.0
        %500 = vmatpush2.msra.mxu0 0.0
        %501 = vmatprep.subr.mxu0 0.0
        %502 = vmatpush2.msra.mxu0 0.0
        %503 = vmatprep.subr.mxu0 0.0
        %504 = vmatpush2.msra.mxu0 0.0
        %505 = vmatprep.subr.mxu0 0.0
        %506 = vmatpush2.msra.mxu0 0.0
        %507 = vmatprep.subr.mxu0 0.0
        %508 = vmatpush2.msra.mxu0 0.0
        %509 = vmatprep.subr.mxu0 0.0
        %510 = vmatpush2.msra.mxu0 0.0
        %511 = vmatprep.subr.mxu0 0.0
        %512 = vmatpush2.msra.mxu0 0.0
        %513 = vmatprep.subr.mxu0 0.0
        %514 = vmatpush2.msra.mxu0 0.0
        %515 = vmatprep.subr.mxu0 0.0
        %516 = vmatpush2.msra.mxu0 0.0
        %517 = vmatprep.subr.mxu0 0.0
        %518 = vmatpush2.msra.mxu0 0.0
        %519 = vmatprep.subr.mxu0 0.0
        %520 = vmatpush2.msra.mxu0 0.0
        %521 = vmatprep.subr.mxu0 0.0
        %522 = vmatpush2.msra.mxu0 0.0
        %523 = vmatprep.subr.mxu0 0.0
        %524 = vmatpush2.msra.mxu0 0.0
        %525 = vmatprep.subr.mxu0 0.0
        %526 = vmatpush2.msra.mxu0 0.0
        %527 = vmatprep.subr.mxu0 0.0
        %528 = vmatpush2.msra.mxu0 0.0
        %529 = vmatprep.subr.mxu0 0.0
        %530 = vmatpush2.msra.mxu0 0.0
        %531 = vmatprep.mubr.f32.mxu0 0.0
        %532 = vmatmul.mubr.f32.gmra.mxu0 %v456
        %v533 = vpop.f32.mrf.mxu0
        %v534 = vadd.f32 0.0, %v533
        %v535 = vpop.f32.mrf.mxu0
        %v536 = vadd.f32 0.0, %v535
        %537 = vmatprep.mubr.f32.mxu0 0.0
        %538 = vmatmul.mubr.f32.gmra.mxu0 %v459
        %v539 = vpop.f32.mrf.mxu0
        %v540 = vadd.f32 0.0, %v539
        %v541 = vpop.f32.mrf.mxu0
        %v542 = vadd.f32 0.0, %v541
        %543 = vdwg.mxu0
        %v544 = vadd.f32 %v420, %v534
        %v545 = vadd.f32 %v422, %v536
        %v546 = vadd.f32 %v426, %v540
        %v547 = vadd.f32 %v428, %v542
        %548 = vrot.lane.b32.xlu0 %v196, 1
        %v549 = vpop.permute.xlu0 %548
        %550 = vrot.lane.b32.xlu0 %v198, 1
        %v551 = vpop.permute.xlu0 %550
        %vm552 = vcmp.lt.s32.totalorder %v205, 1
        %v553 = vsel %vm552, %v549, %v551
        %v554 = vsel %vm552, %v551, %v549
        %s555 = scalar_lea.vmem %s3, 3
        %v556 = vld [vmem:[%s555] ss:$8 sm:$0x3]
        %v558 = vlaneseq
        %v559 = vshrl.u32 %v558, 7
        %v560 = vsub.s32 0, %v559
        %v561 = vrot.slane %v556, %v560
        %v562 = vlaneseq
        %v563 = vshrl.u32 %v562, 7
        %v564 = vsub.s32 1, %v563
        %v565 = vrot.slane %v556, %v564
        %v568 = vmul.f32 %v554, %v561
        %v569 = vmul.f32 %v553, %v565
        %s570 = scalar_lea.vmem %s1, 48
        %v571 = vld [vmem:[%s570] sm:$0xff]
        %v572 = vld [vmem:[%s570 + $0x8] sm:$0xff]
        %v574 = vsel %vm250, %v571, 0
        %v577 = vsel %vm250, %v572, 0
        %v580 = vsel %vm257, %v568, 0
        %v583 = vsel %vm257, %v569, 0
        %585 = vmatprep.subr.mxu0 0.0
        %586 = vmatpush1.msra.mxu0 0.0
        %587 = vmatprep.subr.mxu0 0.0
        %588 = vmatpush1.msra.mxu0 0.0
        %589 = vmatprep.subr.mxu0 0.0
        %590 = vmatpush1.msra.mxu0 0.0
        %591 = vmatprep.subr.mxu0 0.0
        %592 = vmatpush1.msra.mxu0 0.0
        %593 = vmatprep.subr.mxu0 0.0
        %594 = vmatpush1.msra.mxu0 0.0
        %595 = vmatprep.subr.mxu0 0.0
        %596 = vmatpush1.msra.mxu0 0.0
        %597 = vmatprep.subr.mxu0 0.0
        %598 = vmatpush1.msra.mxu0 0.0
        %599 = vmatprep.subr.mxu0 0.0
        %600 = vmatpush1.msra.mxu0 0.0
        %601 = vmatprep.subr.mxu0 0.0
        %602 = vmatpush1.msra.mxu0 0.0
        %603 = vmatprep.subr.mxu0 0.0
        %604 = vmatpush1.msra.mxu0 0.0
        %605 = vmatprep.subr.mxu0 0.0
        %606 = vmatpush1.msra.mxu0 0.0
        %607 = vmatprep.subr.mxu0 0.0
        %608 = vmatpush1.msra.mxu0 0.0
        %609 = vmatprep.subr.mxu0 0.0
        %610 = vmatpush1.msra.mxu0 0.0
        %611 = vmatprep.subr.mxu0 0.0
        %612 = vmatpush1.msra.mxu0 0.0
        %613 = vmatprep.subr.mxu0 0.0
        %614 = vmatpush1.msra.mxu0 0.0
        %615 = vmatprep.subr.mxu0 %v583
        %616 = vmatpush1.msra.mxu0 %v580
        %617 = vmatprep.subr.mxu0 0.0
        %618 = vmatpush2.msra.mxu0 0.0
        %619 = vmatprep.subr.mxu0 0.0
        %620 = vmatpush2.msra.mxu0 0.0
        %621 = vmatprep.subr.mxu0 0.0
        %622 = vmatpush2.msra.mxu0 0.0
        %623 = vmatprep.subr.mxu0 0.0
        %624 = vmatpush2.msra.mxu0 0.0
        %625 = vmatprep.subr.mxu0 0.0
        %626 = vmatpush2.msra.mxu0 0.0
        %627 = vmatprep.subr.mxu0 0.0
        %628 = vmatpush2.msra.mxu0 0.0
        %629 = vmatprep.subr.mxu0 0.0
        %630 = vmatpush2.msra.mxu0 0.0
        %631 = vmatprep.subr.mxu0 0.0
        %632 = vmatpush2.msra.mxu0 0.0
        %633 = vmatprep.subr.mxu0 0.0
        %634 = vmatpush2.msra.mxu0 0.0
        %635 = vmatprep.subr.mxu0 0.0
        %636 = vmatpush2.msra.mxu0 0.0
        %637 = vmatprep.subr.mxu0 0.0
        %638 = vmatpush2.msra.mxu0 0.0
        %639 = vmatprep.subr.mxu0 0.0
        %640 = vmatpush2.msra.mxu0 0.0
        %641 = vmatprep.subr.mxu0 0.0
        %642 = vmatpush2.msra.mxu0 0.0
        %643 = vmatprep.subr.mxu0 0.0
        %644 = vmatpush2.msra.mxu0 0.0
        %645 = vmatprep.subr.mxu0 0.0
        %646 = vmatpush2.msra.mxu0 0.0
        %647 = vmatprep.subr.mxu0 0.0
        %648 = vmatpush2.msra.mxu0 0.0
        %649 = vmatprep.mubr.f32.mxu0 0.0
        %650 = vmatmul.mubr.f32.gmra.mxu0 %v574
        %v651 = vpop.f32.mrf.mxu0
        %v652 = vadd.f32 0.0, %v651
        %v653 = vpop.f32.mrf.mxu0
        %v654 = vadd.f32 0.0, %v653
        %655 = vmatprep.mubr.f32.mxu0 0.0
        %656 = vmatmul.mubr.f32.gmra.mxu0 %v577
        %v657 = vpop.f32.mrf.mxu0
        %v658 = vadd.f32 0.0, %v657
        %v659 = vpop.f32.mrf.mxu0
        %v660 = vadd.f32 0.0, %v659
        %661 = vdwg.mxu0
        %v662 = vadd.f32 %v544, %v652
        %v663 = vadd.f32 %v545, %v654
        %v664 = vadd.f32 %v546, %v658
        %v665 = vadd.f32 %v547, %v660
        %s666 = scalar_lea.vmem %s3, 4
        %v667 = vld [vmem:[%s666] ss:$8 sm:$0x3]
        %v669 = vlaneseq
        %v670 = vshrl.u32 %v669, 7
        %v671 = vsub.s32 0, %v670
        %v672 = vrot.slane %v667, %v671
        %v673 = vlaneseq
        %v674 = vshrl.u32 %v673, 7
        %v675 = vsub.s32 1, %v674
        %v676 = vrot.slane %v667, %v675
        %v677 = vcombine.low %v672, %v676
        %v679 = vmul.f32 %v196, %v677
        %s680 = scalar_lea.vmem %s1, 64
        %v681 = vld [vmem:[%s680] sm:$0xff]
        %v682 = vld [vmem:[%s680 + $0x8] sm:$0xff]
        %v684 = vcombine.high %v679, %v679
        %v686 = vsel %vm250, %v681, 0
        %v689 = vsel %vm250, %v682, 0
        %v691 = vsel %vm257, %v679, 0
        %v693 = vsel %vm257, %v684, 0
        %695 = vmatprep.subr.mxu0 0.0
        %696 = vmatpush1.msra.mxu0 0.0
        %697 = vmatprep.subr.mxu0 0.0
        %698 = vmatpush1.msra.mxu0 0.0
        %699 = vmatprep.subr.mxu0 0.0
        %700 = vmatpush1.msra.mxu0 0.0
        %701 = vmatprep.subr.mxu0 0.0
        %702 = vmatpush1.msra.mxu0 0.0
        %703 = vmatprep.subr.mxu0 0.0
        %704 = vmatpush1.msra.mxu0 0.0
        %705 = vmatprep.subr.mxu0 0.0
        %706 = vmatpush1.msra.mxu0 0.0
        %707 = vmatprep.subr.mxu0 0.0
        %708 = vmatpush1.msra.mxu0 0.0
        %709 = vmatprep.subr.mxu0 0.0
        %710 = vmatpush1.msra.mxu0 0.0
        %711 = vmatprep.subr.mxu0 0.0
        %712 = vmatpush1.msra.mxu0 0.0
        %713 = vmatprep.subr.mxu0 0.0
        %714 = vmatpush1.msra.mxu0 0.0
        %715 = vmatprep.subr.mxu0 0.0
        %716 = vmatpush1.msra.mxu0 0.0
        %717 = vmatprep.subr.mxu0 0.0
        %718 = vmatpush1.msra.mxu0 0.0
        %719 = vmatprep.subr.mxu0 0.0
        %720 = vmatpush1.msra.mxu0 0.0
        %721 = vmatprep.subr.mxu0 0.0
        %722 = vmatpush1.msra.mxu0 0.0
        %723 = vmatprep.subr.mxu0 0.0
        %724 = vmatpush1.msra.mxu0 0.0
        %725 = vmatprep.subr.mxu0 %v693
        %726 = vmatpush1.msra.mxu0 %v691
        %727 = vmatprep.subr.mxu0 0.0
        %728 = vmatpush2.msra.mxu0 0.0
        %729 = vmatprep.subr.mxu0 0.0
        %730 = vmatpush2.msra.mxu0 0.0
        %731 = vmatprep.subr.mxu0 0.0
        %732 = vmatpush2.msra.mxu0 0.0
        %733 = vmatprep.subr.mxu0 0.0
        %734 = vmatpush2.msra.mxu0 0.0
        %735 = vmatprep.subr.mxu0 0.0
        %736 = vmatpush2.msra.mxu0 0.0
        %737 = vmatprep.subr.mxu0 0.0
        %738 = vmatpush2.msra.mxu0 0.0
        %739 = vmatprep.subr.mxu0 0.0
        %740 = vmatpush2.msra.mxu0 0.0
        %741 = vmatprep.subr.mxu0 0.0
        %742 = vmatpush2.msra.mxu0 0.0
        %743 = vmatprep.subr.mxu0 0.0
        %744 = vmatpush2.msra.mxu0 0.0
        %745 = vmatprep.subr.mxu0 0.0
        %746 = vmatpush2.msra.mxu0 0.0
        %747 = vmatprep.subr.mxu0 0.0
        %748 = vmatpush2.msra.mxu0 0.0
        %749 = vmatprep.subr.mxu0 0.0
        %750 = vmatpush2.msra.mxu0 0.0
        %751 = vmatprep.subr.mxu0 0.0
        %752 = vmatpush2.msra.mxu0 0.0
        %753 = vmatprep.subr.mxu0 0.0
        %754 = vmatpush2.msra.mxu0 0.0
        %755 = vmatprep.subr.mxu0 0.0
        %756 = vmatpush2.msra.mxu0 0.0
        %757 = vmatprep.subr.mxu0 0.0
        %758 = vmatpush2.msra.mxu0 0.0
        %759 = vmatprep.mubr.f32.mxu0 0.0
        %760 = vmatmul.mubr.f32.gmra.mxu0 %v686
        %v761 = vpop.f32.mrf.mxu0
        %v762 = vadd.f32 0.0, %v761
        %v763 = vpop.f32.mrf.mxu0
        %v764 = vadd.f32 0.0, %v763
        %765 = vmatprep.mubr.f32.mxu0 0.0
        %766 = vmatmul.mubr.f32.gmra.mxu0 %v689
        %v767 = vpop.f32.mrf.mxu0
        %v768 = vadd.f32 0.0, %v767
        %v769 = vpop.f32.mrf.mxu0
        %v770 = vadd.f32 0.0, %v769
        %771 = vdwg.mxu0
        %v772 = vadd.f32 %v662, %v762
        %v773 = vadd.f32 %v663, %v764
        %v774 = vadd.f32 %v664, %v768
        %v775 = vadd.f32 %v665, %v770
        %776 = vrot.lane.b32.xlu0 %v196, 127
        %v777 = vpop.permute.xlu0 %776
        %778 = vrot.lane.b32.xlu0 %v198, 127
        %v779 = vpop.permute.xlu0 %778
        %vm780 = vcmp.lt.s32.totalorder %v205, 127
        %v781 = vsel %vm780, %v777, %v779
        %v782 = vsel %vm780, %v779, %v777
        %s783 = scalar_lea.vmem %s3, 5
        %v784 = vld [vmem:[%s783] ss:$8 sm:$0x3]
        %v786 = vlaneseq
        %v787 = vshrl.u32 %v786, 7
        %v788 = vsub.s32 0, %v787
        %v789 = vrot.slane %v784, %v788
        %v790 = vlaneseq
        %v791 = vshrl.u32 %v790, 7
        %v792 = vsub.s32 1, %v791
        %v793 = vrot.slane %v784, %v792
        %v796 = vmul.f32 %v781, %v789
        %v797 = vmul.f32 %v782, %v793
        %s798 = scalar_lea.vmem %s1, 80
        %v799 = vld [vmem:[%s798] sm:$0xff]
        %v800 = vld [vmem:[%s798 + $0x8] sm:$0xff]
        %v802 = vsel %vm250, %v799, 0
        %v805 = vsel %vm250, %v800, 0
        %v808 = vsel %vm257, %v796, 0
        %v811 = vsel %vm257, %v797, 0
        %813 = vmatprep.subr.mxu0 0.0
        %814 = vmatpush1.msra.mxu0 0.0
        %815 = vmatprep.subr.mxu0 0.0
        %816 = vmatpush1.msra.mxu0 0.0
        %817 = vmatprep.subr.mxu0 0.0
        %818 = vmatpush1.msra.mxu0 0.0
        %819 = vmatprep.subr.mxu0 0.0
        %820 = vmatpush1.msra.mxu0 0.0
        %821 = vmatprep.subr.mxu0 0.0
        %822 = vmatpush1.msra.mxu0 0.0
        %823 = vmatprep.subr.mxu0 0.0
        %824 = vmatpush1.msra.mxu0 0.0
        %825 = vmatprep.subr.mxu0 0.0
        %826 = vmatpush1.msra.mxu0 0.0
        %827 = vmatprep.subr.mxu0 0.0
        %828 = vmatpush1.msra.mxu0 0.0
        %829 = vmatprep.subr.mxu0 0.0
        %830 = vmatpush1.msra.mxu0 0.0
        %831 = vmatprep.subr.mxu0 0.0
        %832 = vmatpush1.msra.mxu0 0.0
        %833 = vmatprep.subr.mxu0 0.0
        %834 = vmatpush1.msra.mxu0 0.0
        %835 = vmatprep.subr.mxu0 0.0
        %836 = vmatpush1.msra.mxu0 0.0
        %837 = vmatprep.subr.mxu0 0.0
        %838 = vmatpush1.msra.mxu0 0.0
        %839 = vmatprep.subr.mxu0 0.0
        %840 = vmatpush1.msra.mxu0 0.0
        %841 = vmatprep.subr.mxu0 0.0
        %842 = vmatpush1.msra.mxu0 0.0
        %843 = vmatprep.subr.mxu0 %v811
        %844 = vmatpush1.msra.mxu0 %v808
        %845 = vmatprep.subr.mxu0 0.0
        %846 = vmatpush2.msra.mxu0 0.0
        %847 = vmatprep.subr.mxu0 0.0
        %848 = vmatpush2.msra.mxu0 0.0
        %849 = vmatprep.subr.mxu0 0.0
        %850 = vmatpush2.msra.mxu0 0.0
        %851 = vmatprep.subr.mxu0 0.0
        %852 = vmatpush2.msra.mxu0 0.0
        %853 = vmatprep.subr.mxu0 0.0
        %854 = vmatpush2.msra.mxu0 0.0
        %855 = vmatprep.subr.mxu0 0.0
        %856 = vmatpush2.msra.mxu0 0.0
        %857 = vmatprep.subr.mxu0 0.0
        %858 = vmatpush2.msra.mxu0 0.0
        %859 = vmatprep.subr.mxu0 0.0
        %860 = vmatpush2.msra.mxu0 0.0
        %861 = vmatprep.subr.mxu0 0.0
        %862 = vmatpush2.msra.mxu0 0.0
        %863 = vmatprep.subr.mxu0 0.0
        %864 = vmatpush2.msra.mxu0 0.0
        %865 = vmatprep.subr.mxu0 0.0
        %866 = vmatpush2.msra.mxu0 0.0
        %867 = vmatprep.subr.mxu0 0.0
        %868 = vmatpush2.msra.mxu0 0.0
        %869 = vmatprep.subr.mxu0 0.0
        %870 = vmatpush2.msra.mxu0 0.0
        %871 = vmatprep.subr.mxu0 0.0
        %872 = vmatpush2.msra.mxu0 0.0
        %873 = vmatprep.subr.mxu0 0.0
        %874 = vmatpush2.msra.mxu0 0.0
        %875 = vmatprep.subr.mxu0 0.0
        %876 = vmatpush2.msra.mxu0 0.0
        %877 = vmatprep.mubr.f32.mxu0 0.0
        %878 = vmatmul.mubr.f32.gmra.mxu0 %v802
        %v879 = vpop.f32.mrf.mxu0
        %v880 = vadd.f32 0.0, %v879
        %v881 = vpop.f32.mrf.mxu0
        %v882 = vadd.f32 0.0, %v881
        %883 = vmatprep.mubr.f32.mxu0 0.0
        %884 = vmatmul.mubr.f32.gmra.mxu0 %v805
        %v885 = vpop.f32.mrf.mxu0
        %v886 = vadd.f32 0.0, %v885
        %v887 = vpop.f32.mrf.mxu0
        %v888 = vadd.f32 0.0, %v887
        %889 = vdwg.mxu0
        %v890 = vadd.f32 %v772, %v880
        %v891 = vadd.f32 %v773, %v882
        %v892 = vadd.f32 %v774, %v886
        %v893 = vadd.f32 %v775, %v888
        %894 = vrot.lane.b32.xlu0 %v196, 113
        %v895 = vpop.permute.xlu0 %894
        %896 = vrot.lane.b32.xlu0 %v198, 113
        %v897 = vpop.permute.xlu0 %896
        %vm898 = vcmp.lt.s32.totalorder %v205, 113
        %v899 = vsel %vm898, %v895, %v897
        %v900 = vsel %vm898, %v897, %v895
        %s901 = scalar_lea.vmem %s3, 6
        %v902 = vld [vmem:[%s901] ss:$8 sm:$0x3]
        %v904 = vlaneseq
        %v905 = vshrl.u32 %v904, 7
        %v906 = vsub.s32 0, %v905
        %v907 = vrot.slane %v902, %v906
        %v908 = vlaneseq
        %v909 = vshrl.u32 %v908, 7
        %v910 = vsub.s32 1, %v909
        %v911 = vrot.slane %v902, %v910
        %v914 = vmul.f32 %v899, %v907
        %v915 = vmul.f32 %v900, %v911
        %s916 = scalar_lea.vmem %s1, 96
        %v917 = vld [vmem:[%s916] sm:$0xff]
        %v918 = vld [vmem:[%s916 + $0x8] sm:$0xff]
        %v920 = vsel %vm250, %v917, 0
        %v923 = vsel %vm250, %v918, 0
        %v926 = vsel %vm257, %v914, 0
        %v929 = vsel %vm257, %v915, 0
        %931 = vmatprep.subr.mxu0 0.0
        %932 = vmatpush1.msra.mxu0 0.0
        %933 = vmatprep.subr.mxu0 0.0
        %934 = vmatpush1.msra.mxu0 0.0
        %935 = vmatprep.subr.mxu0 0.0
        %936 = vmatpush1.msra.mxu0 0.0
        %937 = vmatprep.subr.mxu0 0.0
        %938 = vmatpush1.msra.mxu0 0.0
        %939 = vmatprep.subr.mxu0 0.0
        %940 = vmatpush1.msra.mxu0 0.0
        %941 = vmatprep.subr.mxu0 0.0
        %942 = vmatpush1.msra.mxu0 0.0
        %943 = vmatprep.subr.mxu0 0.0
        %944 = vmatpush1.msra.mxu0 0.0
        %945 = vmatprep.subr.mxu0 0.0
        %946 = vmatpush1.msra.mxu0 0.0
        %947 = vmatprep.subr.mxu0 0.0
        %948 = vmatpush1.msra.mxu0 0.0
        %949 = vmatprep.subr.mxu0 0.0
        %950 = vmatpush1.msra.mxu0 0.0
        %951 = vmatprep.subr.mxu0 0.0
        %952 = vmatpush1.msra.mxu0 0.0
        %953 = vmatprep.subr.mxu0 0.0
        %954 = vmatpush1.msra.mxu0 0.0
        %955 = vmatprep.subr.mxu0 0.0
        %956 = vmatpush1.msra.mxu0 0.0
        %957 = vmatprep.subr.mxu0 0.0
        %958 = vmatpush1.msra.mxu0 0.0
        %959 = vmatprep.subr.mxu0 0.0
        %960 = vmatpush1.msra.mxu0 0.0
        %961 = vmatprep.subr.mxu0 %v929
        %962 = vmatpush1.msra.mxu0 %v926
        %963 = vmatprep.subr.mxu0 0.0
        %964 = vmatpush2.msra.mxu0 0.0
        %965 = vmatprep.subr.mxu0 0.0
        %966 = vmatpush2.msra.mxu0 0.0
        %967 = vmatprep.subr.mxu0 0.0
        %968 = vmatpush2.msra.mxu0 0.0
        %969 = vmatprep.subr.mxu0 0.0
        %970 = vmatpush2.msra.mxu0 0.0
        %971 = vmatprep.subr.mxu0 0.0
        %972 = vmatpush2.msra.mxu0 0.0
        %973 = vmatprep.subr.mxu0 0.0
        %974 = vmatpush2.msra.mxu0 0.0
        %975 = vmatprep.subr.mxu0 0.0
        %976 = vmatpush2.msra.mxu0 0.0
        %977 = vmatprep.subr.mxu0 0.0
        %978 = vmatpush2.msra.mxu0 0.0
        %979 = vmatprep.subr.mxu0 0.0
        %980 = vmatpush2.msra.mxu0 0.0
        %981 = vmatprep.subr.mxu0 0.0
        %982 = vmatpush2.msra.mxu0 0.0
        %983 = vmatprep.subr.mxu0 0.0
        %984 = vmatpush2.msra.mxu0 0.0
        %985 = vmatprep.subr.mxu0 0.0
        %986 = vmatpush2.msra.mxu0 0.0
        %987 = vmatprep.subr.mxu0 0.0
        %988 = vmatpush2.msra.mxu0 0.0
        %989 = vmatprep.subr.mxu0 0.0
        %990 = vmatpush2.msra.mxu0 0.0
        %991 = vmatprep.subr.mxu0 0.0
        %992 = vmatpush2.msra.mxu0 0.0
        %993 = vmatprep.subr.mxu0 0.0
        %994 = vmatpush2.msra.mxu0 0.0
        %995 = vmatprep.mubr.f32.mxu0 0.0
        %996 = vmatmul.mubr.f32.gmra.mxu0 %v920
        %v997 = vpop.f32.mrf.mxu0
        %v998 = vadd.f32 0.0, %v997
        %v999 = vpop.f32.mrf.mxu0
        %v1000 = vadd.f32 0.0, %v999
        %1001 = vmatprep.mubr.f32.mxu0 0.0
        %1002 = vmatmul.mubr.f32.gmra.mxu0 %v923
        %v1003 = vpop.f32.mrf.mxu0
        %v1004 = vadd.f32 0.0, %v1003
        %v1005 = vpop.f32.mrf.mxu0
        %v1006 = vadd.f32 0.0, %v1005
        %1007 = vdwg.mxu0
        %v1008 = vadd.f32 %v890, %v998
        %v1009 = vadd.f32 %v891, %v1000
        %v1010 = vadd.f32 %v892, %v1004
        %v1011 = vadd.f32 %v893, %v1006
        %1012 = vrot.lane.b32.xlu0 %v196, 112
        %v1013 = vpop.permute.xlu0 %1012
        %1014 = vrot.lane.b32.xlu0 %v198, 112
        %v1015 = vpop.permute.xlu0 %1014
        %vm1016 = vcmp.lt.s32.totalorder %v205, 112
        %v1017 = vsel %vm1016, %v1013, %v1015
        %v1018 = vsel %vm1016, %v1015, %v1013
        %s1019 = scalar_lea.vmem %s3, 7
        %v1020 = vld [vmem:[%s1019] ss:$8 sm:$0x3]
        %v1022 = vlaneseq
        %v1023 = vshrl.u32 %v1022, 7
        %v1024 = vsub.s32 0, %v1023
        %v1025 = vrot.slane %v1020, %v1024
        %v1026 = vlaneseq
        %v1027 = vshrl.u32 %v1026, 7
        %v1028 = vsub.s32 1, %v1027
        %v1029 = vrot.slane %v1020, %v1028
        %v1032 = vmul.f32 %v1017, %v1025
        %v1033 = vmul.f32 %v1018, %v1029
        %s1034 = scalar_lea.vmem %s1, 112
        %v1035 = vld [vmem:[%s1034] sm:$0xff]
        %v1036 = vld [vmem:[%s1034 + $0x8] sm:$0xff]
        %v1038 = vsel %vm250, %v1035, 0
        %v1041 = vsel %vm250, %v1036, 0
        %v1044 = vsel %vm257, %v1032, 0
        %v1047 = vsel %vm257, %v1033, 0
        %1049 = vmatprep.subr.mxu0 0.0
        %1050 = vmatpush1.msra.mxu0 0.0
        %1051 = vmatprep.subr.mxu0 0.0
        %1052 = vmatpush1.msra.mxu0 0.0
        %1053 = vmatprep.subr.mxu0 0.0
        %1054 = vmatpush1.msra.mxu0 0.0
        %1055 = vmatprep.subr.mxu0 0.0
        %1056 = vmatpush1.msra.mxu0 0.0
        %1057 = vmatprep.subr.mxu0 0.0
        %1058 = vmatpush1.msra.mxu0 0.0
        %1059 = vmatprep.subr.mxu0 0.0
        %1060 = vmatpush1.msra.mxu0 0.0
        %1061 = vmatprep.subr.mxu0 0.0
        %1062 = vmatpush1.msra.mxu0 0.0
        %1063 = vmatprep.subr.mxu0 0.0
        %1064 = vmatpush1.msra.mxu0 0.0
        %1065 = vmatprep.subr.mxu0 0.0
        %1066 = vmatpush1.msra.mxu0 0.0
        %1067 = vmatprep.subr.mxu0 0.0
        %1068 = vmatpush1.msra.mxu0 0.0
        %1069 = vmatprep.subr.mxu0 0.0
        %1070 = vmatpush1.msra.mxu0 0.0
        %1071 = vmatprep.subr.mxu0 0.0
        %1072 = vmatpush1.msra.mxu0 0.0
        %1073 = vmatprep.subr.mxu0 0.0
        %1074 = vmatpush1.msra.mxu0 0.0
        %1075 = vmatprep.subr.mxu0 0.0
        %1076 = vmatpush1.msra.mxu0 0.0
        %1077 = vmatprep.subr.mxu0 0.0
        %1078 = vmatpush1.msra.mxu0 0.0
        %1079 = vmatprep.subr.mxu0 %v1047
        %1080 = vmatpush1.msra.mxu0 %v1044
        %1081 = vmatprep.subr.mxu0 0.0
        %1082 = vmatpush2.msra.mxu0 0.0
        %1083 = vmatprep.subr.mxu0 0.0
        %1084 = vmatpush2.msra.mxu0 0.0
        %1085 = vmatprep.subr.mxu0 0.0
        %1086 = vmatpush2.msra.mxu0 0.0
        %1087 = vmatprep.subr.mxu0 0.0
        %1088 = vmatpush2.msra.mxu0 0.0
        %1089 = vmatprep.subr.mxu0 0.0
        %1090 = vmatpush2.msra.mxu0 0.0
        %1091 = vmatprep.subr.mxu0 0.0
        %1092 = vmatpush2.msra.mxu0 0.0
        %1093 = vmatprep.subr.mxu0 0.0
        %1094 = vmatpush2.msra.mxu0 0.0
        %1095 = vmatprep.subr.mxu0 0.0
        %1096 = vmatpush2.msra.mxu0 0.0
        %1097 = vmatprep.subr.mxu0 0.0
        %1098 = vmatpush2.msra.mxu0 0.0
        %1099 = vmatprep.subr.mxu0 0.0
        %1100 = vmatpush2.msra.mxu0 0.0
        %1101 = vmatprep.subr.mxu0 0.0
        %1102 = vmatpush2.msra.mxu0 0.0
        %1103 = vmatprep.subr.mxu0 0.0
        %1104 = vmatpush2.msra.mxu0 0.0
        %1105 = vmatprep.subr.mxu0 0.0
        %1106 = vmatpush2.msra.mxu0 0.0
        %1107 = vmatprep.subr.mxu0 0.0
        %1108 = vmatpush2.msra.mxu0 0.0
        %1109 = vmatprep.subr.mxu0 0.0
        %1110 = vmatpush2.msra.mxu0 0.0
        %1111 = vmatprep.subr.mxu0 0.0
        %1112 = vmatpush2.msra.mxu0 0.0
        %1113 = vmatprep.mubr.f32.mxu0 0.0
        %1114 = vmatmul.mubr.f32.gmra.mxu0 %v1038
        %v1115 = vpop.f32.mrf.mxu0
        %v1116 = vadd.f32 0.0, %v1115
        %v1117 = vpop.f32.mrf.mxu0
        %v1118 = vadd.f32 0.0, %v1117
        %1119 = vmatprep.mubr.f32.mxu0 0.0
        %1120 = vmatmul.mubr.f32.gmra.mxu0 %v1041
        %v1121 = vpop.f32.mrf.mxu0
        %v1122 = vadd.f32 0.0, %v1121
        %v1123 = vpop.f32.mrf.mxu0
        %v1124 = vadd.f32 0.0, %v1123
        %1125 = vdwg.mxu0
        %v1126 = vadd.f32 %v1008, %v1116
        %v1127 = vadd.f32 %v1009, %v1118
        %v1128 = vadd.f32 %v1010, %v1122
        %v1129 = vadd.f32 %v1011, %v1124
        %1130 = vrot.lane.b32.xlu0 %v196, 111
        %v1131 = vpop.permute.xlu0 %1130
        %1132 = vrot.lane.b32.xlu0 %v198, 111
        %v1133 = vpop.permute.xlu0 %1132
        %vm1134 = vcmp.lt.s32.totalorder %v205, 111
        %v1135 = vsel %vm1134, %v1131, %v1133
        %v1136 = vsel %vm1134, %v1133, %v1131
        %s1137 = scalar_lea.vmem %s3, 16
        %v1138 = vld [vmem:[%s1137] ss:$8 sm:$0x3]
        %v1140 = vlaneseq
        %v1141 = vshrl.u32 %v1140, 7
        %v1142 = vsub.s32 0, %v1141
        %v1143 = vrot.slane %v1138, %v1142
        %v1144 = vlaneseq
        %v1145 = vshrl.u32 %v1144, 7
        %v1146 = vsub.s32 1, %v1145
        %v1147 = vrot.slane %v1138, %v1146
        %v1150 = vmul.f32 %v1135, %v1143
        %v1151 = vmul.f32 %v1136, %v1147
        %s1152 = scalar_lea.vmem %s1, 128
        %v1153 = vld [vmem:[%s1152] sm:$0xff]
        %v1154 = vld [vmem:[%s1152 + $0x8] sm:$0xff]
        %v1156 = vsel %vm250, %v1153, 0
        %v1159 = vsel %vm250, %v1154, 0
        %v1162 = vsel %vm257, %v1150, 0
        %v1165 = vsel %vm257, %v1151, 0
        %1167 = vmatprep.subr.mxu0 0.0
        %1168 = vmatpush1.msra.mxu0 0.0
        %1169 = vmatprep.subr.mxu0 0.0
        %1170 = vmatpush1.msra.mxu0 0.0
        %1171 = vmatprep.subr.mxu0 0.0
        %1172 = vmatpush1.msra.mxu0 0.0
        %1173 = vmatprep.subr.mxu0 0.0
        %1174 = vmatpush1.msra.mxu0 0.0
        %1175 = vmatprep.subr.mxu0 0.0
        %1176 = vmatpush1.msra.mxu0 0.0
        %1177 = vmatprep.subr.mxu0 0.0
        %1178 = vmatpush1.msra.mxu0 0.0
        %1179 = vmatprep.subr.mxu0 0.0
        %1180 = vmatpush1.msra.mxu0 0.0
        %1181 = vmatprep.subr.mxu0 0.0
        %1182 = vmatpush1.msra.mxu0 0.0
        %1183 = vmatprep.subr.mxu0 0.0
        %1184 = vmatpush1.msra.mxu0 0.0
        %1185 = vmatprep.subr.mxu0 0.0
        %1186 = vmatpush1.msra.mxu0 0.0
        %1187 = vmatprep.subr.mxu0 0.0
        %1188 = vmatpush1.msra.mxu0 0.0
        %1189 = vmatprep.subr.mxu0 0.0
        %1190 = vmatpush1.msra.mxu0 0.0
        %1191 = vmatprep.subr.mxu0 0.0
        %1192 = vmatpush1.msra.mxu0 0.0
        %1193 = vmatprep.subr.mxu0 0.0
        %1194 = vmatpush1.msra.mxu0 0.0
        %1195 = vmatprep.subr.mxu0 0.0
        %1196 = vmatpush1.msra.mxu0 0.0
        %1197 = vmatprep.subr.mxu0 %v1165
        %1198 = vmatpush1.msra.mxu0 %v1162
        %1199 = vmatprep.subr.mxu0 0.0
        %1200 = vmatpush2.msra.mxu0 0.0
        %1201 = vmatprep.subr.mxu0 0.0
        %1202 = vmatpush2.msra.mxu0 0.0
        %1203 = vmatprep.subr.mxu0 0.0
        %1204 = vmatpush2.msra.mxu0 0.0
        %1205 = vmatprep.subr.mxu0 0.0
        %1206 = vmatpush2.msra.mxu0 0.0
        %1207 = vmatprep.subr.mxu0 0.0
        %1208 = vmatpush2.msra.mxu0 0.0
        %1209 = vmatprep.subr.mxu0 0.0
        %1210 = vmatpush2.msra.mxu0 0.0
        %1211 = vmatprep.subr.mxu0 0.0
        %1212 = vmatpush2.msra.mxu0 0.0
        %1213 = vmatprep.subr.mxu0 0.0
        %1214 = vmatpush2.msra.mxu0 0.0
        %1215 = vmatprep.subr.mxu0 0.0
        %1216 = vmatpush2.msra.mxu0 0.0
        %1217 = vmatprep.subr.mxu0 0.0
        %1218 = vmatpush2.msra.mxu0 0.0
        %1219 = vmatprep.subr.mxu0 0.0
        %1220 = vmatpush2.msra.mxu0 0.0
        %1221 = vmatprep.subr.mxu0 0.0
        %1222 = vmatpush2.msra.mxu0 0.0
        %1223 = vmatprep.subr.mxu0 0.0
        %1224 = vmatpush2.msra.mxu0 0.0
        %1225 = vmatprep.subr.mxu0 0.0
        %1226 = vmatpush2.msra.mxu0 0.0
        %1227 = vmatprep.subr.mxu0 0.0
        %1228 = vmatpush2.msra.mxu0 0.0
        %1229 = vmatprep.subr.mxu0 0.0
        %1230 = vmatpush2.msra.mxu0 0.0
        %1231 = vmatprep.mubr.f32.mxu0 0.0
        %1232 = vmatmul.mubr.f32.gmra.mxu0 %v1156
        %v1233 = vpop.f32.mrf.mxu0
        %v1234 = vadd.f32 0.0, %v1233
        %v1235 = vpop.f32.mrf.mxu0
        %v1236 = vadd.f32 0.0, %v1235
        %1237 = vmatprep.mubr.f32.mxu0 0.0
        %1238 = vmatmul.mubr.f32.gmra.mxu0 %v1159
        %v1239 = vpop.f32.mrf.mxu0
        %v1240 = vadd.f32 0.0, %v1239
        %v1241 = vpop.f32.mrf.mxu0
        %v1242 = vadd.f32 0.0, %v1241
        %1243 = vdwg.mxu0
        %v1244 = vadd.f32 %v1126, %v1234
        %v1245 = vadd.f32 %v1127, %v1236
        %v1246 = vadd.f32 %v1128, %v1240
        %v1247 = vadd.f32 %v1129, %v1242
        %v1248 = vld [vmem:[%s2] sm:$0xff]
        %v1249 = vld [vmem:[%s2 + $0x8] sm:$0xff]
        %1251 = vset.pattern.permute.xlu0 0
        %1252 = vperm.xlu0 %1251, %v1248
        %v1253 = vpop.permute.xlu0 %1252
        %1256 = vset.pattern.permute.xlu0 0
        %1257 = vperm.xlu0 %1256, %v1249
        %v1258 = vpop.permute.xlu0 %1257
        %v1260 = vadd.f32 %v1244, %v1253
        %v1261 = vadd.f32 %v1245, %v1253
        %v1262 = vadd.f32 %v1246, %v1258
        %v1263 = vadd.f32 %v1247, %v1258
        %v1264 = vmul.f32 %v1260, 0.1
        %v1265 = vmul.f32 %v1261, 0.1
        %v1266 = vmul.f32 %v1262, 0.1
        %v1267 = vmul.f32 %v1263, 0.1
        %v1268 = vmax.f32 %v1260, %v1264
        %v1269 = vmax.f32 %v1261, %v1265
        %v1270 = vmax.f32 %v1262, %v1266
        %v1271 = vmax.f32 %v1263, %v1267
        %1272 = vst [vmem:[%s190] sm:$0xff] %v1268
        %1273 = vst [vmem:[%s190 + $0x8] sm:$0xff] %v1269
        %1274 = vst [vmem:[%s190 + $0x10] sm:$0xff] %v1270
        %1275 = vst [vmem:[%s190 + $0x18] sm:$0xff] %v1271
        %s1276 = sand.u32 %s115, 1
        %s1277 = scalar_lea.sflag [#allocation3], %s1276
        %s1278 = sand.u32 %s115, 1
        %s1279 = smul.addr %s1278, 32
        %s1280 = scalar_lea.vmem [#allocation2], %s1279
        // Predicated region
        $region37: #{tpu_custom_call.1} parent=35 // pred_check
          %p1281 = pneg %p125
        $region38: #{tpu_custom_call.1} parent=35 // pred_check_branch
          %1283 = sbr.rel (%p1281) target = $region40
        $region39: #{tpu_custom_call.1} parent=35 // pred_region
          %s1285 = ssub.s32 512, 512
          %1286 = vsyncadd %s1277, %s1285
          %s1287 = smul.addr %s18, 4
          %s1288 = smul.addr %s1287, 128
          %s1289 = scalar_lea.hbm %s4, %s1288
          %s1290 = sshll.u32 %s1280, 4
          %s1291 = int_to_ptr.vmem [resolvable:$true] %s1290
          %1296 = dma.vmem_to_hbm [thread:$0]  %s1291, 512, %s1289, %s1277, 256, 256, 16
        $region40: #{tpu_custom_call.1} parent=35 // pred_fallthru
          _
      $region36: #{tpu_custom_call.1} parent=5 // pred_fallthru
        _
      %p1297 = scmp.le.s32.totalorder 2, %s13
      // Predicated region
      $region41: #{tpu_custom_call.1} parent=5 // pred_check
        %p1298 = pneg %p1297
      $region42: #{tpu_custom_call.1} parent=5 // pred_check_branch
        %1300 = sbr.rel (%p1298) target = $region44
      $region43: #{tpu_custom_call.1} parent=5 // pred_region
        %s1301 = ssub.s32 %s13, 2
        // Predicated region
        $region45: #{tpu_custom_call.1} parent=43 // pred_check
          %p1302 = pneg %p131
        $region46: #{tpu_custom_call.1} parent=43 // pred_check_branch
          %1304 = sbr.rel (%p1302) target = $region48
        $region47: #{tpu_custom_call.1} parent=43 // pred_region
          %s1305 = sand.u32 %s116, 1
          %s1306 = scalar_lea.sflag [#allocation3], %s1305
          %s1307 = sand.u32 %s116, 1
          %s1308 = smul.addr %s1307, 32
          %s1309 = scalar_lea.vmem [#allocation2], %s1308
          %1310 = dma.done %s1306, 512
        $region48: #{tpu_custom_call.1} parent=43 // pred_fallthru
          _
      $region44: #{tpu_custom_call.1} parent=5 // pred_fallthru
        _
    $region6: #{tpu_custom_call.1} parent=1 // loop_footer
      %s17 = sadd.s32 1, %s13
    $region7: #{tpu_custom_call.1} parent=1 // loop_footer_branch
      %12 = sbr.rel target = $region3
    $region8: #{tpu_custom_call.1} parent=1 // loop_exit
      _
    %1311 = vsyncpa [#allocation3], 1
    %s1312 = scalar_lea.sflag [#allocation3], 1
    %1313 = vsyncpa %s1312, 1

</llo_original>
